<compile_context>
chip_gen: v5e
topology: v5e:2x2
jax: 0.10.0
libtpu: 0.0.40
codegen_flags: <defaults>
</compile_context>

<pallas_src>
import jax
import jax.numpy as jnp
from jax.experimental import pallas as pl
from jax.experimental.pallas import tpu as pltpu


def _mlp_kernel_t(x_ref, w1t_ref, b1_ref, w2t_ref, b2_ref, w3t_ref, b3_ref, o_ref):
    # Transposed (lane-dense) layout. Shapes inside one grid step:
    #   x_ref  : (2, TILE_N)    w1t_ref: (H, 2)    b1_ref: (H, 1)
    #   w2t_ref: (H, H)         b2_ref : (H, 1)
    #   w3t_ref: (O, H)         b3_ref : (O, 1)
    #   o_ref  : (O, TILE_N)
    x_t = x_ref[...]
    w1t = w1t_ref[...]

    # First layer (K=2): VPU outer product instead of a mostly-zero MXU pass.
    h = (w1t[:, 0:1] * x_t[0:1, :]
         + w1t[:, 1:2] * x_t[1:2, :]
         + b1_ref[...])
    h = jnp.maximum(h, 0.0)

    h = jnp.dot(w2t_ref[...], h, preferred_element_type=jnp.float32) + b2_ref[...]
    h = jnp.maximum(h, 0.0)

    out = jnp.dot(w3t_ref[...], h, preferred_element_type=jnp.float32) + b3_ref[...]
    o_ref[...] = out.astype(o_ref.dtype)


def _round_up(n, m):
    return ((n + m - 1) // m) * m


def _choose_tile_n(n_pad128):
    # Big tiles for pipeline efficiency; keep >=16 grid steps when N is large
    # so both v7x TensorCores stay busy, but never below 512 rows per step.
    tile = min(2048, n_pad128)
    while pl.cdiv(n_pad128, tile) < 16 and tile > 512:
        tile //= 2
    return tile


def positional_encoding_forward(x, params):
    """x: (B, S, 2) float32 court coordinates. Returns (B, S, output_dim)."""
    w1, b1, w2, b2, w3, b3 = params
    B, S, in_dim = x.shape
    assert in_dim == 2
    hidden_dim = w1.shape[1]
    output_dim = w3.shape[1]

    N = B * S
    n_pad128 = _round_up(N, 128)
    tile_n = _choose_tile_n(n_pad128)
    n_pad = _round_up(n_pad128, tile_n)
    grid = (n_pad // tile_n,)

    # Lane-dense layout: rows -> lanes.  (2, n_pad) in, (output_dim, n_pad) out.
    x_t = jnp.zeros((in_dim, n_pad), x.dtype).at[:, :N].set(x.reshape(N, in_dim).T)

    # Transposed weights so the kernel computes W^T @ X^T == (X @ W)^T.
    w1t = w1.T                              # (H, 2)
    w2t = w2.T                              # (H, H)
    w3t = w3.T                              # (O, H)
    b1c = b1.reshape(hidden_dim, 1)
    b2c = b2.reshape(hidden_dim, 1)
    b3c = b3.reshape(output_dim, 1)

    def rep(shape):
        # Small constant operand: same full block at every grid step.
        return pl.BlockSpec(shape, lambda i: (0, 0))

    out_t = pl.pallas_call(
        _mlp_kernel_t,
        out_shape=jax.ShapeDtypeStruct((output_dim, n_pad), jnp.float32),
        grid_spec=pl.GridSpec(
            grid=grid,
            in_specs=[
                pl.BlockSpec((in_dim, tile_n), lambda i: (0, i)),
                rep((hidden_dim, in_dim)),
                rep((hidden_dim, 1)),
                rep((hidden_dim, hidden_dim)),
                rep((hidden_dim, 1)),
                rep((output_dim, hidden_dim)),
                rep((output_dim, 1)),
            ],
            out_specs=pl.BlockSpec((output_dim, tile_n), lambda i: (0, i)),
        ),
        compiler_params=pltpu.CompilerParams(
            dimension_semantics=("parallel",),
        ),
    )(x_t, w1t, b1c, w2t, b2c, w3t, b3c)

    # Trim row padding, transpose back to row-major, restore (B, S, O).
    return out_t[:, :N].T.reshape(B, S, output_dim)


def init_params(key, hidden_dim, output_dim, input_dim=2):
    """Deterministic synthetic init (uniform, akin to nn.Linear defaults)."""
    ks = jax.random.split(key, 6)

    def lin(kw, kb, fan_in, fan_out):
        bound = 1.0 / jnp.sqrt(fan_in)
        w = jax.random.uniform(kw, (fan_in, fan_out), jnp.float32, -bound, bound)
        b = jax.random.uniform(kb, (1, fan_out), jnp.float32, -bound, bound)
        return w, b

    w1, b1 = lin(ks[0], ks[1], input_dim, hidden_dim)
    w2, b2 = lin(ks[2], ks[3], hidden_dim, hidden_dim)
    w3, b3 = lin(ks[4], ks[5], hidden_dim, output_dim)
    return (w1, b1, w2, b2, w3, b3)


def reference_forward(x, params):
    w1, b1, w2, b2, w3, b3 = params
    h = jax.nn.relu(x @ w1 + b1[0])
    h = jax.nn.relu(h @ w2 + b2[0])
    return h @ w3 + b3[0]


if __name__ == "__main__":
    key = jax.random.PRNGKey(0)
    k_param, k_x = jax.random.split(key)

    B, S = 2, 8            # batch, sequence length
    hidden_dim = 32
    output_dim = 32

    params = init_params(k_param, hidden_dim, output_dim)
    # global_pos: (x, y) coordinates of the player on the court
    x = jax.random.uniform(k_x, (B, S, 2), jnp.float32)

    out = positional_encoding_forward(x, params)
    out = jax.block_until_ready(out)

    ref = reference_forward(x, params)
    assert out.shape == (B, S, output_dim)
    assert jnp.allclose(out, ref, atol=1e-5, rtol=1e-5), "mismatch vs reference"

    print("KERNEL_OK")
</pallas_src>

<mosaic_0001>
module attributes {stable_mosaic.version = 11 : i64} {
  func.func @_mlp_kernel_t(%arg0: i32, %arg1: memref<2x128xf32, #tpu.memory_space<vmem>>, %arg2: memref<32x2xf32, #tpu.memory_space<vmem>>, %arg3: memref<32x1xf32, #tpu.memory_space<vmem>>, %arg4: memref<32x32xf32, #tpu.memory_space<vmem>>, %arg5: memref<32x1xf32, #tpu.memory_space<vmem>>, %arg6: memref<32x32xf32, #tpu.memory_space<vmem>>, %arg7: memref<32x1xf32, #tpu.memory_space<vmem>>, %arg8: memref<32x128xf32, #tpu.memory_space<vmem>>) attributes {dimension_semantics = [#tpu.dimension_semantics<parallel>], iteration_bounds = array<i64: 1>, scalar_prefetch = 0 : i64, scratch_operands = 0 : i64, tpu.core_type = #tpu.core_type<tc>, window_params = [{transform_indices = @transform_0, window_bounds = array<i64: 2, 128>}, {pipeline_mode = #tpu.pipeline_mode<synchronous>, transform_indices = @transform_1, window_bounds = array<i64: 32, 2>}, {pipeline_mode = #tpu.pipeline_mode<synchronous>, transform_indices = @transform_2, window_bounds = array<i64: 32, 1>}, {pipeline_mode = #tpu.pipeline_mode<synchronous>, transform_indices = @transform_3, window_bounds = array<i64: 32, 32>}, {pipeline_mode = #tpu.pipeline_mode<synchronous>, transform_indices = @transform_4, window_bounds = array<i64: 32, 1>}, {pipeline_mode = #tpu.pipeline_mode<synchronous>, transform_indices = @transform_5, window_bounds = array<i64: 32, 32>}, {pipeline_mode = #tpu.pipeline_mode<synchronous>, transform_indices = @transform_6, window_bounds = array<i64: 32, 1>}, {transform_indices = @transform_7, window_bounds = array<i64: 32, 128>}]} {
    %c0 = arith.constant 0 : index
    %c0_0 = arith.constant 0 : index
    %0 = vector.load %arg1[%c0, %c0_0] : memref<2x128xf32, #tpu.memory_space<vmem>>, vector<2x128xf32>
    %c0_1 = arith.constant 0 : index
    %c0_2 = arith.constant 0 : index
    %1 = vector.load %arg2[%c0_1, %c0_2] : memref<32x2xf32, #tpu.memory_space<vmem>>, vector<32x2xf32>
    %2 = vector.extract_strided_slice %1 {offsets = [0, 0], sizes = [32, 1], strides = [1, 1]} : vector<32x2xf32> to vector<32x1xf32>
    %3 = vector.extract_strided_slice %0 {offsets = [0, 0], sizes = [1, 128], strides = [1, 1]} : vector<2x128xf32> to vector<1x128xf32>
    %4 = vector.broadcast %2 : vector<32x1xf32> to vector<32x128xf32>
    %5 = vector.broadcast %3 : vector<1x128xf32> to vector<32x128xf32>
    %6 = arith.mulf %4, %5 : vector<32x128xf32>
    %7 = vector.extract_strided_slice %1 {offsets = [0, 1], sizes = [32, 1], strides = [1, 1]} : vector<32x2xf32> to vector<32x1xf32>
    %8 = vector.extract_strided_slice %0 {offsets = [1, 0], sizes = [1, 128], strides = [1, 1]} : vector<2x128xf32> to vector<1x128xf32>
    %9 = vector.broadcast %7 : vector<32x1xf32> to vector<32x128xf32>
    %10 = vector.broadcast %8 : vector<1x128xf32> to vector<32x128xf32>
    %11 = arith.mulf %9, %10 : vector<32x128xf32>
    %12 = arith.addf %6, %11 : vector<32x128xf32>
    %c0_3 = arith.constant 0 : index
    %c0_4 = arith.constant 0 : index
    %13 = vector.load %arg3[%c0_3, %c0_4] : memref<32x1xf32, #tpu.memory_space<vmem>>, vector<32x1xf32>
    %14 = vector.broadcast %13 : vector<32x1xf32> to vector<32x128xf32>
    %15 = arith.addf %12, %14 : vector<32x128xf32>
    %cst = arith.constant 0.000000e+00 : f32
    %16 = vector.broadcast %cst : f32 to vector<32x128xf32>
    %17 = arith.maximumf %15, %16 : vector<32x128xf32>
    %c0_5 = arith.constant 0 : index
    %c0_6 = arith.constant 0 : index
    %18 = vector.load %arg4[%c0_5, %c0_6] : memref<32x32xf32, #tpu.memory_space<vmem>>, vector<32x32xf32>
    %cst_7 = arith.constant dense<0.000000e+00> : vector<32x128xf32>
    %19 = tpu.matmul %18, %17, %cst_7 {dimension_numbers = #tpu.dot_dimension_numbers<[1], [0], [0], [1], [0, 0, 1, 1], [], []>} : vector<32x32xf32>, vector<32x128xf32>, vector<32x128xf32> -> vector<32x128xf32>
    %c0_8 = arith.constant 0 : index
    %c0_9 = arith.constant 0 : index
    %20 = vector.load %arg5[%c0_8, %c0_9] : memref<32x1xf32, #tpu.memory_space<vmem>>, vector<32x1xf32>
    %21 = vector.broadcast %20 : vector<32x1xf32> to vector<32x128xf32>
    %22 = arith.addf %19, %21 : vector<32x128xf32>
    %cst_10 = arith.constant 0.000000e+00 : f32
    %23 = vector.broadcast %cst_10 : f32 to vector<32x128xf32>
    %24 = arith.maximumf %22, %23 : vector<32x128xf32>
    %c0_11 = arith.constant 0 : index
    %c0_12 = arith.constant 0 : index
    %25 = vector.load %arg6[%c0_11, %c0_12] : memref<32x32xf32, #tpu.memory_space<vmem>>, vector<32x32xf32>
    %cst_13 = arith.constant dense<0.000000e+00> : vector<32x128xf32>
    %26 = tpu.matmul %25, %24, %cst_13 {dimension_numbers = #tpu.dot_dimension_numbers<[1], [0], [0], [1], [0, 0, 1, 1], [], []>} : vector<32x32xf32>, vector<32x128xf32>, vector<32x128xf32> -> vector<32x128xf32>
    %c0_14 = arith.constant 0 : index
    %c0_15 = arith.constant 0 : index
    %27 = vector.load %arg7[%c0_14, %c0_15] : memref<32x1xf32, #tpu.memory_space<vmem>>, vector<32x1xf32>
    %28 = vector.broadcast %27 : vector<32x1xf32> to vector<32x128xf32>
    %29 = arith.addf %26, %28 : vector<32x128xf32>
    %c0_16 = arith.constant 0 : index
    %c0_17 = arith.constant 0 : index
    %30 = vector.load %arg8[%c0_16, %c0_17] : memref<32x128xf32, #tpu.memory_space<vmem>>, vector<32x128xf32>
    tpu.vector_store %arg8[%c0_16, %c0_17], %29 {strides = array<i32>} : memref<32x128xf32, #tpu.memory_space<vmem>>, vector<32x128xf32>,
    return
  }
  func.func @transform_0(%arg0: i32) -> (i32, i32) {
    %c0_i32 = arith.constant 0 : i32
    %c0_i32_0 = arith.constant 0 : i32
    return %c0_i32, %arg0 : i32, i32
  }
  func.func @transform_1(%arg0: i32) -> (i32, i32) {
    %c0_i32 = arith.constant 0 : i32
    %c0_i32_0 = arith.constant 0 : i32
    %c0_i32_1 = arith.constant 0 : i32
    return %c0_i32, %c0_i32_0 : i32, i32
  }
  func.func @transform_2(%arg0: i32) -> (i32, i32) {
    %c0_i32 = arith.constant 0 : i32
    %c0_i32_0 = arith.constant 0 : i32
    %c0_i32_1 = arith.constant 0 : i32
    return %c0_i32, %c0_i32_0 : i32, i32
  }
  func.func @transform_3(%arg0: i32) -> (i32, i32) {
    %c0_i32 = arith.constant 0 : i32
    %c0_i32_0 = arith.constant 0 : i32
    %c0_i32_1 = arith.constant 0 : i32
    return %c0_i32, %c0_i32_0 : i32, i32
  }
  func.func @transform_4(%arg0: i32) -> (i32, i32) {
    %c0_i32 = arith.constant 0 : i32
    %c0_i32_0 = arith.constant 0 : i32
    %c0_i32_1 = arith.constant 0 : i32
    return %c0_i32, %c0_i32_0 : i32, i32
  }
  func.func @transform_5(%arg0: i32) -> (i32, i32) {
    %c0_i32 = arith.constant 0 : i32
    %c0_i32_0 = arith.constant 0 : i32
    %c0_i32_1 = arith.constant 0 : i32
    return %c0_i32, %c0_i32_0 : i32, i32
  }
  func.func @transform_6(%arg0: i32) -> (i32, i32) {
    %c0_i32 = arith.constant 0 : i32
    %c0_i32_0 = arith.constant 0 : i32
    %c0_i32_1 = arith.constant 0 : i32
    return %c0_i32, %c0_i32_0 : i32, i32
  }
  func.func @transform_7(%arg0: i32) -> (i32, i32) {
    %c0_i32 = arith.constant 0 : i32
    %c0_i32_0 = arith.constant 0 : i32
    return %c0_i32, %arg0 : i32, i32
  }
}

</mosaic_0001>

<llo_original>
// kernel: tpu_custom_call.1
$region0: #{tpu_custom_call.1}
  #allocation0 [shape = 'u32[]', space=smem, size = 0x4, offset = 0x4, fixed_abs, tag = 'smem constant byte address 0x4 - core index']
  #allocation1 [shape = 'u32[72,128]{1,0:T(1,128)}', space=vmem, size = 0x9000, scoped, tag = 'internal scratch']
  %s0 = inlined_call_operand.vmem [shape: f32[2,128], index: 0, kind: input, shape index: {}]
  %s1 = inlined_call_operand.vmem [shape: f32[32,2], index: 1, kind: input, shape index: {}]
  %s2 = inlined_call_operand.vmem [shape: f32[32,1], index: 2, kind: input, shape index: {}]
  %s3 = inlined_call_operand.vmem [shape: f32[32,32], index: 3, kind: input, shape index: {}]
  %s4 = inlined_call_operand.vmem [shape: f32[32,1], index: 4, kind: input, shape index: {}]
  %s5 = inlined_call_operand.vmem [shape: f32[32,32], index: 5, kind: input, shape index: {}]
  %s6 = inlined_call_operand.vmem [shape: f32[32,1], index: 6, kind: input, shape index: {}]
  %s7 = inlined_call_operand.hbm [shape: f32[32,128], index: 7, kind: output, shape index: {}]
  %s8 = sld [smem:[#allocation0]]
  $region38: #{tpu_custom_call.1} parent=0
    _
  %s10 = ssub.s32 1, %s8
  %s11 = scalar_select 0, %s10, %s8
  $region1: #{tpu_custom_call.1} parent=0
    #allocation2 [shape = 'u8[16384]{0}', space=vmem, size = 0x4000, scoped, tag = 'output window, operand 0, single buffered']
    #allocation3 [shape = 's32[1]{0}', space=sflag, size = 0x4, scoped, tag = 'scoped memory for tpu_custom_call.1']
    %12 = vsyncpa [#allocation3], 0
    // Predicated region
    $region2: #{tpu_custom_call.1} parent=1 // pred_check
      _
    $region3: #{tpu_custom_call.1} parent=1 // pred_check_branch
      %14 = sbr.rel (0) target = $region5
    $region4: #{tpu_custom_call.1} parent=1 // pred_region
      _
    $region5: #{tpu_custom_call.1} parent=1 // pred_fallthru
      _
    // Predicated region
    $region6: #{tpu_custom_call.1} parent=1 // pred_check
      _
    $region7: #{tpu_custom_call.1} parent=1 // pred_check_branch
      %16 = sbr.rel (0) target = $region9
    $region8: #{tpu_custom_call.1} parent=1 // pred_region
      _
    $region9: #{tpu_custom_call.1} parent=1 // pred_fallthru
      _
    // Predicated region
    $region10: #{tpu_custom_call.1} parent=1 // pred_check
      _
    $region11: #{tpu_custom_call.1} parent=1 // pred_check_branch
      %18 = sbr.rel (0) target = $region13
    $region12: #{tpu_custom_call.1} parent=1 // pred_region
      _
    $region13: #{tpu_custom_call.1} parent=1 // pred_fallthru
      _
    // Predicated region
    $region14: #{tpu_custom_call.1} parent=1 // pred_check
      _
    $region15: #{tpu_custom_call.1} parent=1 // pred_check_branch
      %20 = sbr.rel (0) target = $region17
    $region16: #{tpu_custom_call.1} parent=1 // pred_region
      _
    $region17: #{tpu_custom_call.1} parent=1 // pred_fallthru
      _
    // Predicated region
    $region18: #{tpu_custom_call.1} parent=1 // pred_check
      _
    $region19: #{tpu_custom_call.1} parent=1 // pred_check_branch
      %22 = sbr.rel (0) target = $region21
    $region20: #{tpu_custom_call.1} parent=1 // pred_region
      _
    $region21: #{tpu_custom_call.1} parent=1 // pred_fallthru
      _
    // Predicated region
    $region22: #{tpu_custom_call.1} parent=1 // pred_check
      _
    $region23: #{tpu_custom_call.1} parent=1 // pred_check_branch
      %24 = sbr.rel (0) target = $region25
    $region24: #{tpu_custom_call.1} parent=1 // pred_region
      _
    $region25: #{tpu_custom_call.1} parent=1 // pred_fallthru
      _
    // Predicated region
    $region26: #{tpu_custom_call.1} parent=1 // pred_check
      _
    $region27: #{tpu_custom_call.1} parent=1 // pred_check_branch
      %26 = sbr.rel (0) target = $region29
    $region28: #{tpu_custom_call.1} parent=1 // pred_region
      _
    $region29: #{tpu_custom_call.1} parent=1 // pred_fallthru
      _
    %v27 = vld [vmem:[%s0] sm:$0x3]
    %v28 = vld [vmem:[%s1] sm:$0xff]
    %v29 = vld [vmem:[%s1 + $0x8] sm:$0xff]
    %v30 = vld [vmem:[%s1 + $0x10] sm:$0xff]
    %v31 = vld [vmem:[%s1 + $0x18] sm:$0xff]
    %33 = vset.pattern.permute.xlu0 0
    %34 = vperm.xlu0 %33, %v28
    %v35 = vpop.permute.xlu0 %34
    %38 = vset.pattern.permute.xlu0 0
    %39 = vperm.xlu0 %38, %v29
    %v40 = vpop.permute.xlu0 %39
    %43 = vset.pattern.permute.xlu0 0
    %44 = vperm.xlu0 %43, %v30
    %v45 = vpop.permute.xlu0 %44
    %48 = vset.pattern.permute.xlu0 0
    %49 = vperm.xlu0 %48, %v31
    %v50 = vpop.permute.xlu0 %49
    %v52 = vperm.slane %v27, 0
    %v53 = vmul.f32 %v35, %v52
    %v54 = vmul.f32 %v40, %v52
    %v55 = vmul.f32 %v45, %v52
    %v56 = vmul.f32 %v50, %v52
    %57 = vset.pattern.permute.xlu0 1
    %58 = vperm.xlu0 %57, %v28
    %v59 = vpop.permute.xlu0 %58
    %61 = vset.pattern.permute.xlu0 1
    %62 = vperm.xlu0 %61, %v29
    %v63 = vpop.permute.xlu0 %62
    %65 = vset.pattern.permute.xlu0 1
    %66 = vperm.xlu0 %65, %v30
    %v67 = vpop.permute.xlu0 %66
    %69 = vset.pattern.permute.xlu0 1
    %70 = vperm.xlu0 %69, %v31
    %v71 = vpop.permute.xlu0 %70
    %v73 = vperm.slane %v27, 1
    %v74 = vmul.f32 %v59, %v73
    %v75 = vmul.f32 %v63, %v73
    %v76 = vmul.f32 %v67, %v73
    %v77 = vmul.f32 %v71, %v73
    %v78 = vadd.f32 %v53, %v74
    %v79 = vadd.f32 %v54, %v75
    %v80 = vadd.f32 %v55, %v76
    %v81 = vadd.f32 %v56, %v77
    %v82 = vld [vmem:[%s2] sm:$0xff]
    %v83 = vld [vmem:[%s2 + $0x8] sm:$0xff]
    %v84 = vld [vmem:[%s2 + $0x10] sm:$0xff]
    %v85 = vld [vmem:[%s2 + $0x18] sm:$0xff]
    %87 = vset.pattern.permute.xlu0 0
    %88 = vperm.xlu0 %87, %v82
    %v89 = vpop.permute.xlu0 %88
    %92 = vset.pattern.permute.xlu0 0
    %93 = vperm.xlu0 %92, %v83
    %v94 = vpop.permute.xlu0 %93
    %97 = vset.pattern.permute.xlu0 0
    %98 = vperm.xlu0 %97, %v84
    %v99 = vpop.permute.xlu0 %98
    %102 = vset.pattern.permute.xlu0 0
    %103 = vperm.xlu0 %102, %v85
    %v104 = vpop.permute.xlu0 %103
    %v106 = vadd.f32 %v78, %v89
    %v107 = vadd.f32 %v79, %v94
    %v108 = vadd.f32 %v80, %v99
    %v109 = vadd.f32 %v81, %v104
    %v110 = vmax.f32 %v106, 0.0
    %v111 = vmax.f32 %v107, 0.0
    %v112 = vmax.f32 %v108, 0.0
    %v113 = vmax.f32 %v109, 0.0
    %v114 = vld [vmem:[%s3] sm:$0xff]
    %v115 = vld [vmem:[%s3 + $0x8] sm:$0xff]
    %v116 = vld [vmem:[%s3 + $0x10] sm:$0xff]
    %v117 = vld [vmem:[%s3 + $0x18] sm:$0xff]
    %v118 = vld [vmem:[%s4] sm:$0xff]
    %v119 = vld [vmem:[%s4 + $0x8] sm:$0xff]
    %v120 = vld [vmem:[%s4 + $0x10] sm:$0xff]
    %v121 = vld [vmem:[%s4 + $0x18] sm:$0xff]
    %123 = vset.pattern.permute.xlu0 0
    %124 = vperm.xlu0 %123, %v118
    %v125 = vpop.permute.xlu0 %124
    %128 = vset.pattern.permute.xlu0 0
    %129 = vperm.xlu0 %128, %v119
    %v130 = vpop.permute.xlu0 %129
    %133 = vset.pattern.permute.xlu0 0
    %134 = vperm.xlu0 %133, %v120
    %v135 = vpop.permute.xlu0 %134
    %138 = vset.pattern.permute.xlu0 0
    %139 = vperm.xlu0 %138, %v121
    %v140 = vpop.permute.xlu0 %139
    %vm142 = vcmask 261120
    %v144 = vsel %vm142, %v114, 0
    %v147 = vsel %vm142, %v115, 0
    %v150 = vsel %vm142, %v116, 0
    %v153 = vsel %vm142, %v117, 0
    %155 = vmatpush.msra.mxu0 0.0
    %156 = vmatpush.msra.mxu0 0.0
    %157 = vmatpush.msra.mxu0 0.0
    %158 = vmatpush.msra.mxu0 0.0
    %159 = vmatpush.msra.mxu0 0.0
    %160 = vmatpush.msra.mxu0 0.0
    %161 = vmatpush.msra.mxu0 0.0
    %162 = vmatpush.msra.mxu0 0.0
    %163 = vmatpush.msra.mxu0 0.0
    %164 = vmatpush.msra.mxu0 0.0
    %165 = vmatpush.msra.mxu0 0.0
    %166 = vmatpush.msra.mxu0 0.0
    %167 = vmatpush.msra.mxu0 %v113
    %168 = vmatpush.msra.mxu0 %v112
    %169 = vmatpush.msra.mxu0 %v111
    %170 = vmatpush.msra.mxu0 %v110
    %171 = vmatmul.f32.gmra.mxu0 %v144
    %v172 = vpop.f32.mrf.mxu0
    %v173 = vadd.f32 %v125, %v172
    %174 = vmatmul.f32.gmra.mxu0 %v147
    %v175 = vpop.f32.mrf.mxu0
    %v176 = vadd.f32 %v130, %v175
    %177 = vmatmul.f32.gmra.mxu0 %v150
    %v178 = vpop.f32.mrf.mxu0
    %v179 = vadd.f32 %v135, %v178
    %180 = vmatmul.f32.gmra.mxu0 %v153
    %v181 = vpop.f32.mrf.mxu0
    %v182 = vadd.f32 %v140, %v181
    %183 = vdwg.mxu0
    %v184 = vmax.f32 %v173, 0.0
    %v185 = vmax.f32 %v176, 0.0
    %v186 = vmax.f32 %v179, 0.0
    %v187 = vmax.f32 %v182, 0.0
    %v188 = vld [vmem:[%s5] sm:$0xff]
    %v189 = vld [vmem:[%s5 + $0x8] sm:$0xff]
    %v190 = vld [vmem:[%s5 + $0x10] sm:$0xff]
    %v191 = vld [vmem:[%s5 + $0x18] sm:$0xff]
    %v192 = vld [vmem:[%s6] sm:$0xff]
    %v193 = vld [vmem:[%s6 + $0x8] sm:$0xff]
    %v194 = vld [vmem:[%s6 + $0x10] sm:$0xff]
    %v195 = vld [vmem:[%s6 + $0x18] sm:$0xff]
    %197 = vset.pattern.permute.xlu0 0
    %198 = vperm.xlu0 %197, %v192
    %v199 = vpop.permute.xlu0 %198
    %202 = vset.pattern.permute.xlu0 0
    %203 = vperm.xlu0 %202, %v193
    %v204 = vpop.permute.xlu0 %203
    %207 = vset.pattern.permute.xlu0 0
    %208 = vperm.xlu0 %207, %v194
    %v209 = vpop.permute.xlu0 %208
    %212 = vset.pattern.permute.xlu0 0
    %213 = vperm.xlu0 %212, %v195
    %v214 = vpop.permute.xlu0 %213
    %v217 = vsel %vm142, %v188, 0
    %v220 = vsel %vm142, %v189, 0
    %v223 = vsel %vm142, %v190, 0
    %v226 = vsel %vm142, %v191, 0
    %228 = vmatpush.msra.mxu0 0.0
    %229 = vmatpush.msra.mxu0 0.0
    %230 = vmatpush.msra.mxu0 0.0
    %231 = vmatpush.msra.mxu0 0.0
    %232 = vmatpush.msra.mxu0 0.0
    %233 = vmatpush.msra.mxu0 0.0
    %234 = vmatpush.msra.mxu0 0.0
    %235 = vmatpush.msra.mxu0 0.0
    %236 = vmatpush.msra.mxu0 0.0
    %237 = vmatpush.msra.mxu0 0.0
    %238 = vmatpush.msra.mxu0 0.0
    %239 = vmatpush.msra.mxu0 0.0
    %240 = vmatpush.msra.mxu0 %v187
    %241 = vmatpush.msra.mxu0 %v186
    %242 = vmatpush.msra.mxu0 %v185
    %243 = vmatpush.msra.mxu0 %v184
    %244 = vmatmul.f32.gmra.mxu0 %v217
    %v245 = vpop.f32.mrf.mxu0
    %v246 = vadd.f32 %v199, %v245
    %247 = vmatmul.f32.gmra.mxu0 %v220
    %v248 = vpop.f32.mrf.mxu0
    %v249 = vadd.f32 %v204, %v248
    %250 = vmatmul.f32.gmra.mxu0 %v223
    %v251 = vpop.f32.mrf.mxu0
    %v252 = vadd.f32 %v209, %v251
    %253 = vmatmul.f32.gmra.mxu0 %v226
    %v254 = vpop.f32.mrf.mxu0
    %v255 = vadd.f32 %v214, %v254
    %256 = vdwg.mxu0
    %257 = vst [vmem:[#allocation2] sm:$0xff] %v246
    %258 = vst [vmem:[#allocation2 + $0x8] sm:$0xff] %v249
    %259 = vst [vmem:[#allocation2 + $0x10] sm:$0xff] %v252
    %260 = vst [vmem:[#allocation2 + $0x18] sm:$0xff] %v255
    // Predicated region
    $region30: #{tpu_custom_call.1} parent=1 // pred_check
      _
    $region31: #{tpu_custom_call.1} parent=1 // pred_check_branch
      %262 = sbr.rel (0) target = $region33
    $region32: #{tpu_custom_call.1} parent=1 // pred_region
      %264 = vsyncadd [#allocation3], 0
      %s265 = sshll.u32 [#allocation2], 4
      %s266 = int_to_ptr.vmem [resolvable:$true] %s265
      %s267 = sshll.u32 %s7, 4
      %s268 = int_to_ptr.hbm [resolvable:$true] %s267
      %273 = dma.vmem_to_hbm [thread:$0]  %s266, 512, %s268, [#allocation3], 128, 128, 8
    $region33: #{tpu_custom_call.1} parent=1 // pred_fallthru
      _
    // Predicated region
    $region34: #{tpu_custom_call.1} parent=1 // pred_check
      _
    $region35: #{tpu_custom_call.1} parent=1 // pred_check_branch
      %275 = sbr.rel (0) target = $region37
    $region36: #{tpu_custom_call.1} parent=1 // pred_region
      %277 = dma.done [#allocation3], 512
    $region37: #{tpu_custom_call.1} parent=1 // pred_fallthru
      _
    %278 = vsyncpa [#allocation3], 1

</llo_original>
